<compile_context>
chip_gen: v5e
topology: v5e:2x2
jax: 0.10.0
libtpu: 0.0.40
codegen_flags: <defaults>
</compile_context>

<pallas_src>
import math

import jax
import jax.numpy as jnp
from jax.experimental import pallas as pl
from jax.experimental.pallas import tpu as pltpu

LANE = 128  # TPU lane width; output feature dims are padded to a multiple of this.


def round_up(x, m):
    return -(-x // m) * m


def pad_to(a, shape, fill=0.0):
    out = jnp.full(shape, fill, a.dtype)
    return out.at[tuple(slice(0, s) for s in a.shape)].set(a)


# ---------------- Pallas kernels ----------------

def feature_transform_kernel(x_ref, w_ref, xw_ref):
    # XW = X @ W, computed once per layer (hoisted out of the A_hat streaming loop),
    # emitted as bf16 so the big A @ XW stream runs bf16 on the MXU.
    xw_ref[...] = jnp.dot(
        x_ref[...], w_ref[...], preferred_element_type=jnp.float32
    ).astype(xw_ref.dtype)


def gcn_aggregate_kernel(a_ref, xw_ref, b_ref, o_ref, acc_ref):
    # relu(A_hat @ XW + b).  Grid = (row tiles, reduction tiles).
    # XW is VMEM-resident (full-array block); the current K slab is taken with pl.ds.
    k = pl.program_id(1)
    tk = a_ref.shape[1]

    @pl.when(k == 0)
    def _():
        acc_ref[...] = jnp.zeros_like(acc_ref)

    off = pl.multiple_of(k * tk, tk)
    acc_ref[...] += jnp.dot(a_ref[...], xw_ref[pl.ds(off, tk), :],
                            preferred_element_type=jnp.float32)

    @pl.when(k == pl.num_programs(1) - 1)
    def _():
        o_ref[...] = jnp.maximum(acc_ref[...] + b_ref[...], 0.0).astype(o_ref.dtype)


def epilogue_kernel(p_ref, emb_ref, w1_ref, b1_ref, w2_ref, b2_ref,
                    h_ref, logits_ref, probs_ref, acc_ref):
    # Fused: mean-pool (P @ emb, reduced over node tiles) -> Linear+ELU -> Linear -> softmax.
    k = pl.program_id(0)

    @pl.when(k == 0)
    def _():
        acc_ref[...] = jnp.zeros_like(acc_ref)

    acc_ref[...] += jnp.dot(p_ref[...], emb_ref[...],
                            preferred_element_type=jnp.float32)

    @pl.when(k == pl.num_programs(0) - 1)
    def _():
        pooled = acc_ref[...]
        y = jnp.dot(pooled, w1_ref[...],
                    preferred_element_type=jnp.float32) + b1_ref[...]
        h = jnp.where(y > 0.0, y, jnp.exp(jnp.minimum(y, 0.0)) - 1.0)  # ELU(alpha=1)
        h_ref[...] = h
        logits = jnp.dot(h, w2_ref[...],
                         preferred_element_type=jnp.float32) + b2_ref[...]
        logits_ref[...] = logits
        m = jnp.max(logits, axis=-1, keepdims=True)
        e = jnp.exp(logits - m)        # padded class columns carry -1e9 bias -> exp == 0
        probs_ref[...] = e / jnp.sum(e, axis=-1, keepdims=True)


# ---------------- pallas_call wrappers ----------------

def gcn_layer(a_bf16, x_pad, w_pad, b_pad, *, tm, tk):
    """One GCNConv(normalize=True) + ReLU on node-padded inputs; bf16 output."""
    n_pad = a_bf16.shape[0]
    f_in = x_pad.shape[1]
    lane = w_pad.shape[1]

    # (1) small kernel: XW once, bf16 output (never recomputed inside the A stream).
    xw = pl.pallas_call(
        feature_transform_kernel,
        out_shape=jax.ShapeDtypeStruct((n_pad, lane), jnp.bfloat16),
        grid=(n_pad // tm,),
        in_specs=[pl.BlockSpec((tm, f_in), lambda i: (i, 0)),
                  pl.BlockSpec((f_in, lane), lambda i: (0, 0))],
        out_specs=pl.BlockSpec((tm, lane), lambda i: (i, 0)),
        compiler_params=pltpu.CompilerParams(
            dimension_semantics=("parallel",)),
    )(x_pad, w_pad)

    # (2) hot path: stream bf16 A_hat tiles, XW VMEM-resident, f32 accumulation,
    #     fused bias + ReLU, bf16 writeback.
    nbm, nbk = n_pad // tm, n_pad // tk
    flops = 2 * n_pad * n_pad * lane
    bytes_accessed = (n_pad * n_pad * 2      # A_hat bf16 (dominant)
                      + n_pad * lane * 2     # XW loaded once (resident)
                      + n_pad * lane * 2)    # bf16 output writeback
    vmem_need = (2 * tm * tk * 2             # A tile, double-buffered, bf16
                 + 2 * n_pad * lane * 2      # resident XW (worst case 2 buffers)
                 + 2 * tm * lane * 2         # output tile, double-buffered, bf16
                 + tm * lane * 4)            # f32 accumulator
    # Cap at 48 MiB so 2-deep pipelining survives v7x's 64 MiB physical VMEM.
    # TODO(synk): on v5e/v6e (128 MiB VMEM) raise the cap to ~96 MiB and use tm=2048, tk=4096.
    vmem_limit = int(min(max(vmem_need * 5 // 4, 32 * 1024 * 1024), 48 * 1024 * 1024))
    # TODO(synk): narrow A_hat further (fp8 on v7x, int8 on v5e/v6e) with a global scale
    # for another ~2x on the HBM-bound stream once accuracy is re-validated.
    return pl.pallas_call(
        gcn_aggregate_kernel,
        out_shape=jax.ShapeDtypeStruct((n_pad, lane), jnp.bfloat16),
        grid=(nbm, nbk),
        in_specs=[pl.BlockSpec((tm, tk), lambda i, k: (i, k)),
                  pl.BlockSpec((n_pad, lane), lambda i, k: (0, 0)),   # XW resident in VMEM
                  pl.BlockSpec((1, lane), lambda i, k: (0, 0))],
        out_specs=pl.BlockSpec((tm, lane), lambda i, k: (i, 0)),
        scratch_shapes=[pltpu.VMEM((tm, lane), jnp.float32)],
        compiler_params=pltpu.CompilerParams(
            dimension_semantics=("parallel", "arbitrary"),
            vmem_limit_bytes=vmem_limit),
        cost_estimate=pl.CostEstimate(flops=int(flops), transcendentals=0,
                                      bytes_accessed=int(bytes_accessed)),
    )(a_bf16, xw, b_pad)


def readout_mlp_head(pool_pad, emb_pad, w1_pad, b1_pad, w2_pad, b2_pad, *, tk):
    """Fused mean-pool + MLP hidden (ELU) + output Linear + softmax in one launch."""
    g_pad, n_pad = pool_pad.shape
    emb_lane = emb_pad.shape[1]
    hid_lane = w1_pad.shape[1]
    out_lane = w2_pad.shape[1]
    return pl.pallas_call(
        epilogue_kernel,
        out_shape=(jax.ShapeDtypeStruct((g_pad, hid_lane), jnp.float32),
                   jax.ShapeDtypeStruct((g_pad, out_lane), jnp.float32),
                   jax.ShapeDtypeStruct((g_pad, out_lane), jnp.float32)),
        grid=(n_pad // tk,),
        in_specs=[pl.BlockSpec((g_pad, tk), lambda k: (0, k)),
                  pl.BlockSpec((tk, emb_lane), lambda k: (k, 0)),
                  pl.BlockSpec((emb_lane, hid_lane), lambda k: (0, 0)),
                  pl.BlockSpec((1, hid_lane), lambda k: (0, 0)),
                  pl.BlockSpec((hid_lane, out_lane), lambda k: (0, 0)),
                  pl.BlockSpec((1, out_lane), lambda k: (0, 0))],
        out_specs=(pl.BlockSpec((g_pad, hid_lane), lambda k: (0, 0)),
                   pl.BlockSpec((g_pad, out_lane), lambda k: (0, 0)),
                   pl.BlockSpec((g_pad, out_lane), lambda k: (0, 0))),
        scratch_shapes=[pltpu.VMEM((g_pad, emb_lane), jnp.float32)],
        compiler_params=pltpu.CompilerParams(
            dimension_semantics=("arbitrary",)),
    )(pool_pad, emb_pad, w1_pad, b1_pad, w2_pad, b2_pad)


# ---------------- graph preprocessing & params (plain JAX) ----------------

def build_normalized_adj(edge_index, num_nodes, n_pad=None, dtype=jnp.float32):
    """gcn_norm: D^{-1/2} (A + I) D^{-1/2}, built directly at padded size and cast once."""
    # TODO(synk): for genuinely sparse graphs, block the adjacency and skip all-zero
    # tiles via a scalar-prefetched block mask instead of dense O(N^2) streaming.
    n_pad = num_nodes if n_pad is None else n_pad
    a = jnp.zeros((n_pad, n_pad), jnp.float32)
    a = a.at[edge_index[0], edge_index[1]].set(1.0)
    idx = jnp.arange(num_nodes)
    a = a.at[idx, idx].add(1.0)                       # add_self_loops (real nodes only)
    deg = a.sum(axis=1)
    d_inv_sqrt = jnp.where(deg > 0, jax.lax.rsqrt(jnp.maximum(deg, 1e-12)), 0.0)
    return (a * d_inv_sqrt[:, None] * d_inv_sqrt[None, :]).astype(dtype)


def build_mean_pool_matrix(batch, num_graphs, n_pad=None, g_pad=None, dtype=jnp.float32):
    n = batch.shape[0]
    n_pad = n if n_pad is None else n_pad
    g_pad = num_graphs if g_pad is None else g_pad
    batch_pad = jnp.full((n_pad,), -1, batch.dtype).at[:n].set(batch)
    onehot = (batch_pad[None, :] == jnp.arange(g_pad)[:, None]).astype(jnp.float32)
    counts = onehot.sum(axis=1, keepdims=True)
    return (onehot / jnp.maximum(counts, 1.0)).astype(dtype)


def _glorot(key, shape):
    fan_in, fan_out = shape
    lim = jnp.sqrt(6.0 / (fan_in + fan_out))
    return jax.random.uniform(key, shape, jnp.float32, -lim, lim)


def init_params(key, input_dim, latent_dim, mlp_hidden, output_dim, num_readout=1):
    params = {"gnn": [], "mlp_hidden": [], "mlp_out": None}
    dims = [input_dim] + list(latent_dim)
    keys = jax.random.split(key, 16)
    k = 0
    for i in range(len(latent_dim)):
        w = _glorot(keys[k], (dims[i], dims[i + 1])); k += 1
        params["gnn"].append((w, jnp.zeros((dims[i + 1],), jnp.float32)))
    dense_dim = latent_dim[-1] * num_readout
    mlp_dims = [dense_dim] + list(mlp_hidden)
    for i in range(len(mlp_hidden)):
        w = _glorot(keys[k], (mlp_dims[i], mlp_dims[i + 1])); k += 1
        params["mlp_hidden"].append((w, jnp.zeros((mlp_dims[i + 1],), jnp.float32)))
    w = _glorot(keys[k], (mlp_dims[-1], output_dim)); k += 1
    params["mlp_out"] = (w, jnp.zeros((output_dim,), jnp.float32))
    return params


# ---------------- forward ----------------

def gcn_net_forward(params, x, edge_index, batch, num_graphs, *, tm=1024, tk=2048):
    n, f_in = x.shape
    n_pad = round_up(n, math.lcm(tm, tk))
    g_pad = round_up(num_graphs, 8)

    # Padded bf16 adjacency / pool matrix, normalization fused with the pad + cast.
    a_bf16 = build_normalized_adj(edge_index, n, n_pad=n_pad, dtype=jnp.bfloat16)
    pool_bf16 = build_mean_pool_matrix(batch, num_graphs, n_pad=n_pad, g_pad=g_pad,
                                       dtype=jnp.bfloat16)

    # First layer input: keep f32, don't pad the (tiny) feature dim to 128 lanes.
    h = pad_to(x, (n_pad, round_up(f_in, 8)))

    # GNN layers: GCNConv -> ReLU   (emb_normlize = False, dropout off in eval)
    for (w, b) in params["gnn"]:
        out_lane = round_up(w.shape[1], LANE)
        w_pad = pad_to(w, (h.shape[1], out_lane)).astype(h.dtype)
        b_pad = pad_to(b.reshape(1, -1), (1, out_lane))
        h = gcn_layer(a_bf16, h, w_pad, b_pad, tm=tm, tk=tk)     # bf16 output
    emb_pad = h

    # Fused readout('mean') + single MLP hidden + output head.
    # TODO(synk): generalize the fused epilogue to >1 MLP hidden layers.
    assert len(params["mlp_hidden"]) == 1
    (w1, b1), = params["mlp_hidden"]
    w2, b2 = params["mlp_out"]
    hid_lane = round_up(w1.shape[1], LANE)
    out_lane = round_up(w2.shape[1], LANE)
    w1_pad = pad_to(w1, (emb_pad.shape[1], hid_lane))
    b1_pad = pad_to(b1.reshape(1, -1), (1, hid_lane))
    w2_pad = pad_to(w2, (hid_lane, out_lane))
    b2_pad = pad_to(b2.reshape(1, -1), (1, out_lane), fill=-1e9)  # mask padded classes

    feat_pad, logits_pad, probs_pad = readout_mlp_head(
        pool_bf16, emb_pad, w1_pad, b1_pad, w2_pad, b2_pad, tk=tk)

    latent = params["gnn"][-1][0].shape[1]
    hid = w1.shape[1]
    c = w2.shape[1]
    emb = emb_pad[:n, :latent].astype(jnp.float32)
    feat = feat_pad[:num_graphs, :hid]
    logits = logits_pad[:num_graphs, :c]
    probs = probs_pad[:num_graphs, :c]
    return logits, probs, feat, emb


def reference_forward(params, x, a_hat, pool_mat):
    """Pure-JAX f32 reference mirroring the PyTorch module."""
    h = x
    for (w, b) in params["gnn"]:
        h = jnp.maximum(a_hat @ (h @ w) + b, 0.0)
    emb = h
    z = pool_mat @ emb
    for (w, b) in params["mlp_hidden"]:
        y = z @ w + b
        z = jnp.where(y > 0.0, y, jnp.exp(jnp.minimum(y, 0.0)) - 1.0)
    w, b = params["mlp_out"]
    logits = z @ w + b
    probs = jax.nn.softmax(logits, axis=-1)
    return logits, probs, z, emb


# ---------------- demo ----------------

if __name__ == "__main__":
    key = jax.random.PRNGKey(0)
    kx, kp = jax.random.split(key)

    # 2 ring graphs of 160 nodes each; tm=tk=128 keeps the demo small while still
    # exercising a multi-step (3x3) pipelined grid.  Real graphs: tm=1024, tk=2048.
    nodes_per_graph = 160
    num_graphs = 2
    num_nodes = nodes_per_graph * num_graphs
    input_dim = 8
    latent_dim = [32, 32]
    mlp_hidden = [32]
    output_dim = 3
    tm = tk = 128

    x = jax.random.normal(kx, (num_nodes, input_dim), jnp.float32)

    src, dst = [], []
    for gi in range(num_graphs):
        base = gi * nodes_per_graph
        for i in range(nodes_per_graph):
            a, b = base + i, base + (i + 1) % nodes_per_graph
            src += [a, b]
            dst += [b, a]
    edge_index = jnp.array([src, dst], dtype=jnp.int32)
    batch = jnp.repeat(jnp.arange(num_graphs, dtype=jnp.int32), nodes_per_graph)

    params = init_params(kp, input_dim, latent_dim, mlp_hidden, output_dim)

    logits, probs, feat, emb = gcn_net_forward(params, x, edge_index, batch, num_graphs,
                                               tm=tm, tk=tk)
    jax.block_until_ready((logits, probs, feat, emb))

    # correctness vs pure-JAX f32 reference (A_hat / XW / layer outputs in bf16 -> loose tol)
    a_hat_ref = build_normalized_adj(edge_index, num_nodes)     # f32, unpadded
    pool_ref = build_mean_pool_matrix(batch, num_graphs)        # f32, unpadded
    r_logits, r_probs, r_feat, r_emb = reference_forward(params, x, a_hat_ref, pool_ref)

    assert logits.shape == (num_graphs, output_dim)
    assert probs.shape == (num_graphs, output_dim)
    assert feat.shape == (num_graphs, mlp_hidden[-1])
    assert emb.shape == (num_nodes, latent_dim[-1])
    assert bool(jnp.allclose(probs.sum(axis=-1), 1.0, atol=1e-4))
    assert bool(jnp.allclose(emb, r_emb, atol=5e-2, rtol=5e-2))
    assert bool(jnp.allclose(feat, r_feat, atol=5e-2, rtol=5e-2))
    assert bool(jnp.allclose(logits, r_logits, atol=5e-2, rtol=5e-2))
    assert bool(jnp.allclose(probs, r_probs, atol=5e-2))
    print("KERNEL_OK")
</pallas_src>

<mosaic_0001>
module attributes {stable_mosaic.version = 11 : i64} {
  func.func @feature_transform_kernel(%arg0: i32, %arg1: memref<128x8xf32, #tpu.memory_space<vmem>>, %arg2: memref<8x128xf32, #tpu.memory_space<vmem>>, %arg3: memref<128x128xbf16, #tpu.memory_space<vmem>>) attributes {dimension_semantics = [#tpu.dimension_semantics<parallel>], iteration_bounds = array<i64: 3>, scalar_prefetch = 0 : i64, scratch_operands = 0 : i64, tpu.core_type = #tpu.core_type<tc>, window_params = [{transform_indices = @transform_0, window_bounds = array<i64: 128, 8>}, {pipeline_mode = #tpu.pipeline_mode<synchronous>, transform_indices = @transform_1, window_bounds = array<i64: 8, 128>}, {transform_indices = @transform_2, window_bounds = array<i64: 128, 128>}]} {
    %c0 = arith.constant 0 : index
    %c0_0 = arith.constant 0 : index
    %0 = vector.load %arg1[%c0, %c0_0] : memref<128x8xf32, #tpu.memory_space<vmem>>, vector<128x8xf32>
    %c0_1 = arith.constant 0 : index
    %c0_2 = arith.constant 0 : index
    %1 = vector.load %arg2[%c0_1, %c0_2] : memref<8x128xf32, #tpu.memory_space<vmem>>, vector<8x128xf32>
    %cst = arith.constant dense<0.000000e+00> : vector<128x128xf32>
    %2 = tpu.matmul %0, %1, %cst {dimension_numbers = #tpu.dot_dimension_numbers<[1], [0], [0], [1], [0, 0, 1, 1], [], []>} : vector<128x8xf32>, vector<8x128xf32>, vector<128x128xf32> -> vector<128x128xf32>
    %3 = arith.truncf %2 : vector<128x128xf32> to vector<128x128xbf16>
    %c0_3 = arith.constant 0 : index
    %c0_4 = arith.constant 0 : index
    %4 = vector.load %arg3[%c0_3, %c0_4] : memref<128x128xbf16, #tpu.memory_space<vmem>>, vector<128x128xbf16>
    tpu.vector_store %arg3[%c0_3, %c0_4], %3 {strides = array<i32>} : memref<128x128xbf16, #tpu.memory_space<vmem>>, vector<128x128xbf16>,
    return
  }
  func.func @transform_0(%arg0: i32) -> (i32, i32) {
    %c0_i32 = arith.constant 0 : i32
    %c0_i32_0 = arith.constant 0 : i32
    return %arg0, %c0_i32 : i32, i32
  }
  func.func @transform_1(%arg0: i32) -> (i32, i32) {
    %c0_i32 = arith.constant 0 : i32
    %c0_i32_0 = arith.constant 0 : i32
    %c0_i32_1 = arith.constant 0 : i32
    return %c0_i32, %c0_i32_0 : i32, i32
  }
  func.func @transform_2(%arg0: i32) -> (i32, i32) {
    %c0_i32 = arith.constant 0 : i32
    %c0_i32_0 = arith.constant 0 : i32
    return %arg0, %c0_i32 : i32, i32
  }
}

</mosaic_0001>

<llo_original>
// kernel: tpu_custom_call.1
$region0: #{tpu_custom_call.1}
  #allocation0 [shape = 'u32[]', space=smem, size = 0x4, offset = 0x4, fixed_abs, tag = 'smem constant byte address 0x4 - core index']
  #allocation1 [shape = 'u32[72,128]{1,0:T(1,128)}', space=vmem, size = 0x9000, scoped, tag = 'internal scratch']
  %s0 = inlined_call_operand.vmem [shape: f32[384,8], index: 0, kind: input, shape index: {}]
  %s1 = inlined_call_operand.vmem [shape: f32[8,128], index: 1, kind: input, shape index: {}]
  %s2 = inlined_call_operand.hbm [shape: bf16[384,128], index: 2, kind: output, shape index: {}]
  %s3 = sld [smem:[#allocation0]]
  $region41: #{tpu_custom_call.1} parent=0
    _
  %s5 = ssub.s32 1, %s3
  %s6 = scalar_select 0, %s5, %s3
  $region1: #{tpu_custom_call.1} parent=0
    #allocation2 [shape = 'u8[65536]{0}', space=vmem, size = 0x10000, scoped, tag = 'output window, operand 0']
    #allocation3 [shape = 's32[2]{0}', space=sflag, size = 0x8, scoped, tag = 'scoped memory for tpu_custom_call.1']
    %7 = vsyncpa [#allocation3], 0
    %s8 = scalar_lea.sflag [#allocation3], 1
    %9 = vsyncpa %s8, 0
    loop: start=0, step=1, limit=5
    $region2: #{tpu_custom_call.1} parent=1 // loop_pre_header
      _
    $region3: #{tpu_custom_call.1} parent=1 // loop_header
      %s11 = sphi 0, %s15
      %p12 = scmp.ge.s32.totalorder %s11, 5
      %s21 = sphi 0, %s23
      %s24 = sphi 0, %s21
      %s25 = sphi 0, %s24
      %s41 = sphi 0, %s25
      %s45 = sphi 0, %s45
      %s47 = sphi 0, %s45
      %s48 = sphi 0, %s47
      %s62 = sphi 0, %s48
      %s68 = sphi 0, %s70
      %s71 = sphi 0, %s68
      %s72 = sphi 0, %s71
      %s88 = sphi 0, %s72
    $region4: #{tpu_custom_call.1} parent=1 // loop_header_branch
      %14 = sbr.rel (%p12) target = $region8
    $region5: #{tpu_custom_call.1} parent=1 // loop_body
      %s16 = ssub.s32 %s11, 1
      %s17 = ssub.s32 %s11, 2
      %s18 = sadd.s32 %s11, 1
      %s19 = ssub.s32 %s11, %s18
      %p20 = scmp.eq.s32.totalorder %s19, 0
      %s22 = sadd.s32 %s21, 1
      %s23 = scalar_select %p20, %s21, %s22
      %p26 = pneg %p20
      %p27 = scmp.eq.s32.totalorder %s11, 2
      %p28 = por %p26, %p27
      %p29 = scmp.ne.s32.totalorder %s21, %s24
      %p30 = scmp.eq.s32.totalorder %s11, 0
      %p31 = por %p29, %p30
      %p32 = scmp.ne.s32.totalorder %s21, %s24
      %p33 = scmp.eq.s32.totalorder %s16, 2
      %p34 = por %p32, %p33
      %p35 = scmp.ne.s32.totalorder %s24, %s25
      %p36 = scmp.eq.s32.totalorder %s16, 0
      %p37 = por %p35, %p36
      %p38 = scmp.ne.s32.totalorder %s24, %s25
      %p39 = scmp.eq.s32.totalorder %s17, 2
      %p40 = por %p38, %p39
      %p42 = scmp.ne.s32.totalorder %s25, %s41
      %p43 = scmp.eq.s32.totalorder %s17, 0
      %p44 = por %p42, %p43
      %s46 = sadd.s32 %s45, 1
      %p49 = scmp.eq.s32.totalorder %s11, 2
      %p50 = scmp.ne.s32.totalorder %s45, %s47
      %p51 = scmp.eq.s32.totalorder %s11, 0
      %p52 = por %p50, %p51
      %p53 = scmp.ne.s32.totalorder %s45, %s47
      %p54 = scmp.eq.s32.totalorder %s16, 2
      %p55 = por %p53, %p54
      %p56 = scmp.ne.s32.totalorder %s47, %s48
      %p57 = scmp.eq.s32.totalorder %s16, 0
      %p58 = por %p56, %p57
      %p59 = scmp.ne.s32.totalorder %s47, %s48
      %p60 = scmp.eq.s32.totalorder %s17, 2
      %p61 = por %p59, %p60
      %p63 = scmp.ne.s32.totalorder %s48, %s62
      %p64 = scmp.eq.s32.totalorder %s17, 0
      %p65 = por %p63, %p64
      %s66 = ssub.s32 %s11, %s18
      %p67 = scmp.eq.s32.totalorder %s66, 0
      %s69 = sadd.s32 %s68, 1
      %s70 = scalar_select %p67, %s68, %s69
      %p73 = pneg %p67
      %p74 = scmp.eq.s32.totalorder %s11, 2
      %p75 = por %p73, %p74
      %p76 = scmp.ne.s32.totalorder %s68, %s71
      %p77 = scmp.eq.s32.totalorder %s11, 0
      %p78 = por %p76, %p77
      %p79 = scmp.ne.s32.totalorder %s68, %s71
      %p80 = scmp.eq.s32.totalorder %s16, 2
      %p81 = por %p79, %p80
      %p82 = scmp.ne.s32.totalorder %s71, %s72
      %p83 = scmp.eq.s32.totalorder %s16, 0
      %p84 = por %p82, %p83
      %p85 = scmp.ne.s32.totalorder %s71, %s72
      %p86 = scmp.eq.s32.totalorder %s17, 2
      %p87 = por %p85, %p86
      %p89 = scmp.ne.s32.totalorder %s72, %s88
      %p90 = scmp.eq.s32.totalorder %s17, 0
      %p91 = por %p89, %p90
      %p92 = scmp.le.s32.totalorder 1, %s11
      %p93 = scmp.lt.s32.totalorder %s11, 4
      %p94 = pnand %p92, %p93
      %p95 = pneg %p94
      // Predicated region
      $region9: #{tpu_custom_call.1} parent=5 // pred_check
        _
      $region10: #{tpu_custom_call.1} parent=5 // pred_check_branch
        %97 = sbr.rel (%p94) target = $region12
      $region11: #{tpu_custom_call.1} parent=5 // pred_region
        %s98 = ssub.s32 %s11, 1
        // Predicated region
        $region13: #{tpu_custom_call.1} parent=11 // pred_check
          %p99 = pneg %p58
        $region14: #{tpu_custom_call.1} parent=11 // pred_check_branch
          %101 = sbr.rel (%p99) target = $region16
        $region15: #{tpu_custom_call.1} parent=11 // pred_region
          _
        $region16: #{tpu_custom_call.1} parent=11 // pred_fallthru
          _
      $region12: #{tpu_custom_call.1} parent=5 // pred_fallthru
        _
      %p102 = scmp.lt.s32.totalorder %s11, 3
      // Predicated region
      $region17: #{tpu_custom_call.1} parent=5 // pred_check
        %p103 = pneg %p102
      $region18: #{tpu_custom_call.1} parent=5 // pred_check_branch
        %105 = sbr.rel (%p103) target = $region20
      $region19: #{tpu_custom_call.1} parent=5 // pred_region
        // Predicated region
        $region21: #{tpu_custom_call.1} parent=19 // pred_check
          %p106 = pneg %p31
        $region22: #{tpu_custom_call.1} parent=19 // pred_check_branch
          %108 = sbr.rel (%p106) target = $region24
        $region23: #{tpu_custom_call.1} parent=19 // pred_region
          %s109 = smul.u32 16, %s11
          %p110 = scmp.lt.s32.totalorder %s109, 47
          %s111 = scalar_select %p110, %s109, 47
          %s112 = smul.addr %s111, 8
          %s113 = scalar_lea.vmem %s0, %s112
          %s114 = smul.u32 16, %s11
        $region24: #{tpu_custom_call.1} parent=19 // pred_fallthru
          _
      $region20: #{tpu_custom_call.1} parent=5 // pred_fallthru
        _
      %p115 = scmp.le.s32.totalorder 1, %s11
      %p116 = scmp.lt.s32.totalorder %s11, 4
      %p117 = pnand %p115, %p116
      %p118 = pneg %p117
      // Predicated region
      $region25: #{tpu_custom_call.1} parent=5 // pred_check
        _
      $region26: #{tpu_custom_call.1} parent=5 // pred_check_branch
        %120 = sbr.rel (%p117) target = $region28
      $region27: #{tpu_custom_call.1} parent=5 // pred_region
        %s121 = ssub.s32 %s11, 1
        %s122 = smul.u32 16, %s16
        %p123 = scmp.lt.s32.totalorder %s122, 47
        %s124 = scalar_select %p123, %s122, 47
        %s125 = smul.addr %s124, 8
        %s126 = scalar_lea.vmem %s0, %s125
        %p127 = pneg %p37
        %p128 = pneg %p34
        %p129 = pneg %p58
        %p130 = pneg %p55
        %p131 = pneg %p84
        %p132 = pneg %p81
        %s133 = sand.u32 %s71, 1
        %s134 = scalar_lea.sflag [#allocation3], %s133
        %s135 = sand.u32 %s71, 1
        %s136 = smul.addr %s135, 64
        %s137 = scalar_lea.vmem [#allocation2], %s136
        %s138 = smul.u32 16, %s16
        %p139 = scmp.lt.s32.totalorder %s138, 47
        %s140 = scalar_select %p139, %s138, 47
        %s141 = smul.addr %s140, 8
        %s142 = scalar_lea.vmem %s0, %s141
        %s143 = smul.u32 16, %s16
        %s144 = smul.u32 16, %s16
        %v145 = vld [vmem:[%s142] sm:$0xff]
        %v146 = vld [vmem:[%s142 + $0x8] sm:$0xff]
        %v147 = vld [vmem:[%s142 + $0x10] sm:$0xff]
        %v148 = vld [vmem:[%s142 + $0x18] sm:$0xff]
        %v149 = vld [vmem:[%s142 + $0x20] sm:$0xff]
        %v150 = vld [vmem:[%s142 + $0x28] sm:$0xff]
        %v151 = vld [vmem:[%s142 + $0x30] sm:$0xff]
        %v152 = vld [vmem:[%s142 + $0x38] sm:$0xff]
        %v153 = vld [vmem:[%s142 + $0x40] sm:$0xff]
        %v154 = vld [vmem:[%s142 + $0x48] sm:$0xff]
        %v155 = vld [vmem:[%s142 + $0x50] sm:$0xff]
        %v156 = vld [vmem:[%s142 + $0x58] sm:$0xff]
        %v157 = vld [vmem:[%s142 + $0x60] sm:$0xff]
        %v158 = vld [vmem:[%s142 + $0x68] sm:$0xff]
        %v159 = vld [vmem:[%s142 + $0x70] sm:$0xff]
        %v160 = vld [vmem:[%s142 + $0x78] sm:$0xff]
        %v161 = vld [vmem:[%s1] sm:$0xff]
        %vm162 = vcmask 64512
        %v164 = vsel %vm162, %v145, 0
        %v167 = vsel %vm162, %v146, 0
        %v170 = vsel %vm162, %v147, 0
        %v173 = vsel %vm162, %v148, 0
        %v176 = vsel %vm162, %v149, 0
        %v179 = vsel %vm162, %v150, 0
        %v182 = vsel %vm162, %v151, 0
        %v185 = vsel %vm162, %v152, 0
        %v188 = vsel %vm162, %v153, 0
        %v191 = vsel %vm162, %v154, 0
        %v194 = vsel %vm162, %v155, 0
        %v197 = vsel %vm162, %v156, 0
        %v200 = vsel %vm162, %v157, 0
        %v203 = vsel %vm162, %v158, 0
        %v206 = vsel %vm162, %v159, 0
        %v209 = vsel %vm162, %v160, 0
        %211 = vmatpush.msra.mxu0 0.0
        %212 = vmatpush.msra.mxu0 0.0
        %213 = vmatpush.msra.mxu0 0.0
        %214 = vmatpush.msra.mxu0 0.0
        %215 = vmatpush.msra.mxu0 0.0
        %216 = vmatpush.msra.mxu0 0.0
        %217 = vmatpush.msra.mxu0 0.0
        %218 = vmatpush.msra.mxu0 0.0
        %219 = vmatpush.msra.mxu0 0.0
        %220 = vmatpush.msra.mxu0 0.0
        %221 = vmatpush.msra.mxu0 0.0
        %222 = vmatpush.msra.mxu0 0.0
        %223 = vmatpush.msra.mxu0 0.0
        %224 = vmatpush.msra.mxu0 0.0
        %225 = vmatpush.msra.mxu0 0.0
        %226 = vmatpush.msra.mxu0 %v161
        %227 = vmatmul.f32.gmra.mxu0 %v164
        %v228 = vpop.f32.mrf.mxu0
        %v229 = vadd.f32 0.0, %v228
        %230 = vmatmul.f32.gmra.mxu0 %v167
        %v231 = vpop.f32.mrf.mxu0
        %v232 = vadd.f32 0.0, %v231
        %233 = vmatmul.f32.gmra.mxu0 %v170
        %v234 = vpop.f32.mrf.mxu0
        %v235 = vadd.f32 0.0, %v234
        %236 = vmatmul.f32.gmra.mxu0 %v173
        %v237 = vpop.f32.mrf.mxu0
        %v238 = vadd.f32 0.0, %v237
        %239 = vmatmul.f32.gmra.mxu0 %v176
        %v240 = vpop.f32.mrf.mxu0
        %v241 = vadd.f32 0.0, %v240
        %242 = vmatmul.f32.gmra.mxu0 %v179
        %v243 = vpop.f32.mrf.mxu0
        %v244 = vadd.f32 0.0, %v243
        %245 = vmatmul.f32.gmra.mxu0 %v182
        %v246 = vpop.f32.mrf.mxu0
        %v247 = vadd.f32 0.0, %v246
        %248 = vmatmul.f32.gmra.mxu0 %v185
        %v249 = vpop.f32.mrf.mxu0
        %v250 = vadd.f32 0.0, %v249
        %251 = vmatmul.f32.gmra.mxu0 %v188
        %v252 = vpop.f32.mrf.mxu0
        %v253 = vadd.f32 0.0, %v252
        %254 = vmatmul.f32.gmra.mxu0 %v191
        %v255 = vpop.f32.mrf.mxu0
        %v256 = vadd.f32 0.0, %v255
        %257 = vmatmul.f32.gmra.mxu0 %v194
        %v258 = vpop.f32.mrf.mxu0
        %v259 = vadd.f32 0.0, %v258
        %260 = vmatmul.f32.gmra.mxu0 %v197
        %v261 = vpop.f32.mrf.mxu0
        %v262 = vadd.f32 0.0, %v261
        %263 = vmatmul.f32.gmra.mxu0 %v200
        %v264 = vpop.f32.mrf.mxu0
        %v265 = vadd.f32 0.0, %v264
        %266 = vmatmul.f32.gmra.mxu0 %v203
        %v267 = vpop.f32.mrf.mxu0
        %v268 = vadd.f32 0.0, %v267
        %269 = vmatmul.f32.gmra.mxu0 %v206
        %v270 = vpop.f32.mrf.mxu0
        %v271 = vadd.f32 0.0, %v270
        %272 = vmatmul.f32.gmra.mxu0 %v209
        %v273 = vpop.f32.mrf.mxu0
        %v274 = vadd.f32 0.0, %v273
        %275 = vdwg.mxu0
        %v276 = vpack.c.bf16 %v229, %v229
        %v277 = vpack.c.bf16 %v232, %v232
        %v278 = vpack.c.bf16 %v235, %v235
        %v279 = vpack.c.bf16 %v238, %v238
        %v280 = vpack.c.bf16 %v241, %v241
        %v281 = vpack.c.bf16 %v244, %v244
        %v282 = vpack.c.bf16 %v247, %v247
        %v283 = vpack.c.bf16 %v250, %v250
        %v284 = vpack.c.bf16 %v253, %v253
        %v285 = vpack.c.bf16 %v256, %v256
        %v286 = vpack.c.bf16 %v259, %v259
        %v287 = vpack.c.bf16 %v262, %v262
        %v288 = vpack.c.bf16 %v265, %v265
        %v289 = vpack.c.bf16 %v268, %v268
        %v290 = vpack.c.bf16 %v271, %v271
        %v291 = vpack.c.bf16 %v274, %v274
        %292 = vst [vmem:[%s137] sm:$0xf] %v276
        %293 = vst [vmem:[%s137 + $0x4] sm:$0xf] %v277
        %294 = vst [vmem:[%s137 + $0x8] sm:$0xf] %v278
        %295 = vst [vmem:[%s137 + $0xc] sm:$0xf] %v279
        %296 = vst [vmem:[%s137 + $0x10] sm:$0xf] %v280
        %297 = vst [vmem:[%s137 + $0x14] sm:$0xf] %v281
        %298 = vst [vmem:[%s137 + $0x18] sm:$0xf] %v282
        %299 = vst [vmem:[%s137 + $0x1c] sm:$0xf] %v283
        %300 = vst [vmem:[%s137 + $0x20] sm:$0xf] %v284
        %301 = vst [vmem:[%s137 + $0x24] sm:$0xf] %v285
        %302 = vst [vmem:[%s137 + $0x28] sm:$0xf] %v286
        %303 = vst [vmem:[%s137 + $0x2c] sm:$0xf] %v287
        %304 = vst [vmem:[%s137 + $0x30] sm:$0xf] %v288
        %305 = vst [vmem:[%s137 + $0x34] sm:$0xf] %v289
        %306 = vst [vmem:[%s137 + $0x38] sm:$0xf] %v290
        %307 = vst [vmem:[%s137 + $0x3c] sm:$0xf] %v291
        %s308 = sand.u32 %s71, 1
        %s309 = scalar_lea.sflag [#allocation3], %s308
        %s310 = sand.u32 %s71, 1
        %s311 = smul.addr %s310, 64
        %s312 = scalar_lea.vmem [#allocation2], %s311
        // Predicated region
        $region29: #{tpu_custom_call.1} parent=27 // pred_check
          %p313 = pneg %p81
        $region30: #{tpu_custom_call.1} parent=27 // pred_check_branch
          %315 = sbr.rel (%p313) target = $region32
        $region31: #{tpu_custom_call.1} parent=27 // pred_region
          %s316 = smul.u32 16, %s16
          %318 = vsyncadd %s309, 0
          %s319 = smul.addr %s316, 4
          %s320 = scalar_lea.hbm %s2, %s319
          %s321 = sshll.u32 %s312, 4
          %s322 = int_to_ptr.vmem [resolvable:$true] %s321
          %s323 = sshll.u32 %s320, 4
          %s324 = int_to_ptr.hbm [resolvable:$true] %s323
          %329 = dma.vmem_to_hbm [thread:$0]  %s322, 1024, %s324, %s309, 64, 64, 4
        $region32: #{tpu_custom_call.1} parent=27 // pred_fallthru
          _
      $region28: #{tpu_custom_call.1} parent=5 // pred_fallthru
        _
      %p330 = scmp.le.s32.totalorder 2, %s11
      // Predicated region
      $region33: #{tpu_custom_call.1} parent=5 // pred_check
        %p331 = pneg %p330
      $region34: #{tpu_custom_call.1} parent=5 // pred_check_branch
        %333 = sbr.rel (%p331) target = $region36
      $region35: #{tpu_custom_call.1} parent=5 // pred_region
        %s334 = ssub.s32 %s11, 2
        // Predicated region
        $region37: #{tpu_custom_call.1} parent=35 // pred_check
          %p335 = pneg %p87
        $region38: #{tpu_custom_call.1} parent=35 // pred_check_branch
          %337 = sbr.rel (%p335) target = $region40
        $region39: #{tpu_custom_call.1} parent=35 // pred_region
          %s338 = sand.u32 %s72, 1
          %s339 = scalar_lea.sflag [#allocation3], %s338
          %s340 = sand.u32 %s72, 1
          %s341 = smul.addr %s340, 64
          %s342 = scalar_lea.vmem [#allocation2], %s341
          %344 = dma.done %s339, 1024
        $region40: #{tpu_custom_call.1} parent=35 // pred_fallthru
          _
      $region36: #{tpu_custom_call.1} parent=5 // pred_fallthru
        _
    $region6: #{tpu_custom_call.1} parent=1 // loop_footer
      %s15 = sadd.s32 1, %s11
    $region7: #{tpu_custom_call.1} parent=1 // loop_footer_branch
      %10 = sbr.rel target = $region3
    $region8: #{tpu_custom_call.1} parent=1 // loop_exit
      _
    %345 = vsyncpa [#allocation3], 1
    %s346 = scalar_lea.sflag [#allocation3], 1
    %347 = vsyncpa %s346, 1

</llo_original>
